<compile_context>
chip_gen: v5e
topology: v5e:2x2
jax: 0.10.0
libtpu: 0.0.40
codegen_flags: <defaults>
</compile_context>

<pallas_src>
import functools

import jax
import jax.numpy as jnp
import numpy as np
from jax.experimental import pallas as pl
from jax.experimental.pallas import tpu as pltpu

LANE = 128  # lane-dense channel padding


def _vmem_limit_bytes():
    # Half of physical VMEM per generation (v5e/v6e -> 64 MiB, v7x -> 32 MiB); safe fallback 32 MiB.
    try:
        return int(pltpu.get_tpu_info().vmem_capacity_bytes) // 2
    except Exception:
        return 32 * 1024 * 1024


def _pick_l_tile(l, l_tile):
    if l <= l_tile:
        return l
    for cand in range(l_tile, 7, -1):
        if l % cand == 0 and cand % 8 == 0:
            return cand
    return l


def _pick_batch_block(bsz, l, max_rows=2048):
    nb = 1
    for cand in range(1, bsz + 1):
        if bsz % cand == 0 and cand * l <= max_rows:
            nb = cand
    return nb


# ----------------------------- Kernel A: conv1 + pool + routing -----------------------------

def _conv1_pool_route_kernel(x_ref, w1_ref, b1_ref, fcw_ref, fcb_ref,
                             y1_ref, r_ref, pool_ref, *, inv_l):
    l_idx = pl.program_id(1)

    @pl.when(l_idx == 0)
    def _init():
        pool_ref[...] = jnp.zeros_like(pool_ref)

    nb, tl, cin_p = x_ref.shape
    # 1x1 conv as one lane-dense (nb*TL, Cp) x (Cp, Cp) bf16 MXU matmul; BN scale pre-folded in w1.
    x2 = x_ref[...].reshape(nb * tl, cin_p)
    y = jnp.dot(x2, w1_ref[...], preferred_element_type=jnp.float32)
    y = jnp.maximum(y + b1_ref[...], 0.0).reshape(nb, tl, -1)        # f32
    y1_ref[...] = y.astype(jnp.bfloat16)                             # y1 stored bf16 (half HBM)

    # fused global-average-pool: per-sample f32 sums from the pre-cast value.
    # NOTE: correctness requires the L grid axis to stay "arbitrary" (scratch persists across it).
    pool_ref[...] += jnp.sum(y, axis=1)

    @pl.when(l_idx == pl.num_programs(1) - 1)
    def _routing():
        pooled = pool_ref[...] * inv_l                               # (nb, Cp)
        logits = jnp.dot(pooled, fcw_ref[...],
                         preferred_element_type=jnp.float32) + fcb_ref[...]
        r_ref[...] = (1.0 / (1.0 + jnp.exp(-logits)))[:, None, :]    # sigmoid, (nb, 1, E)


def conv1_pool_route(x_bf, w1_bf, b1, fc_w, fc_b, *, l_tile, batch_block):
    bsz, l, cin_p = x_bf.shape
    cp = w1_bf.shape[1]
    e = fc_w.shape[1]
    nb = batch_block
    assert bsz % nb == 0 and l % l_tile == 0
    assert nb == 1 or l_tile == l
    n_lt = l // l_tile
    kernel = functools.partial(_conv1_pool_route_kernel, inv_l=1.0 / l)
    y1, r = pl.pallas_call(
        kernel,
        out_shape=(jax.ShapeDtypeStruct((bsz, l, cp), jnp.bfloat16),
                   jax.ShapeDtypeStruct((bsz, 1, e), jnp.float32)),
        grid=(bsz // nb, n_lt),
        in_specs=[
            pl.BlockSpec((nb, l_tile, cin_p), lambda b, i: (b, i, 0)),
            pl.BlockSpec((cin_p, cp), lambda b, i: (0, 0)),
            pl.BlockSpec((1, cp), lambda b, i: (0, 0)),
            pl.BlockSpec((cp, e), lambda b, i: (0, 0)),
            pl.BlockSpec((1, e), lambda b, i: (0, 0)),
        ],
        out_specs=(
            pl.BlockSpec((nb, l_tile, cp), lambda b, i: (b, i, 0)),
            pl.BlockSpec((nb, 1, e), lambda b, i: (b, 0, 0)),
        ),
        scratch_shapes=[pltpu.VMEM((nb, cp), jnp.float32)],
        compiler_params=pltpu.CompilerParams(
            dimension_semantics=("parallel", "arbitrary"),
            vmem_limit_bytes=_vmem_limit_bytes()),
    )(x_bf, w1_bf, b1, fc_w, fc_b)
    return y1, r[:, 0, :]


# ----------------------------- Kernel B: fused CondConv 3x3 + 1x1 + residual -----------------------------

def _fused_condconv_kernel(r_ref, y1h_ref, wexp_ref, b2_ref, b3_ref, id_ref, o_ref,
                           *, h, w, cp, n_experts, nb):
    bblk = pl.program_id(0)
    for s in range(nb):
        bidx = bblk * nb + s

        # Per-sample expert mix on the VPU in f32 (no R-matrix / iotas, matches reference
        # precision): W = sum_e r_e * W_e over the stacked (3x3 | 1x1) expert bank.
        wmix = r_ref[bidx, 0] * wexp_ref[0].astype(jnp.float32)
        for ei in range(1, n_experts):
            wmix = wmix + r_ref[bidx, ei] * wexp_ref[ei].astype(jnp.float32)
        w2m = wmix[: 9 * cp, :].astype(jnp.bfloat16)                 # mixed 3x3 weight (9*Cp, Cp)
        w3m = wmix[9 * cp:, :].astype(jnp.bfloat16)                  # mixed 1x1 weight (Cp, Cp)

        # CondConv 3x3: 9 static-offset slices of the pre-padded halo concatenated along lanes ->
        # one K = 9*Cp MXU contraction (fills the 256-deep MXU on v6e/v7x, single accumulation).
        taps = [y1h_ref[s, p:p + h, q:q + w, :].reshape(h * w, cp)
                for p in range(3) for q in range(3)]
        patches = jnp.concatenate(taps, axis=1)                      # (h*w, 9*Cp) bf16
        y2 = jnp.dot(patches, w2m, preferred_element_type=jnp.float32)
        y2 = jnp.maximum(y2 + b2_ref[...], 0.0).astype(jnp.bfloat16)  # never leaves VMEM

        # CondConv 1x1 + BN bias + residual + ReLU
        y3 = jnp.dot(y2, w3m, preferred_element_type=jnp.float32)
        o_ref[s] = jnp.maximum(y3 + b3_ref[...] + id_ref[s], 0.0)


def fused_condconv(r, y1_halo, wexp, b2, b3, identity, *, h, w, batch_block):
    bsz, hp, wp, cp = y1_halo.shape
    assert hp == h + 2 and wp == w + 2
    l = h * w
    n_experts = wexp.shape[0]
    nb = batch_block
    assert bsz % nb == 0
    kernel = functools.partial(_fused_condconv_kernel, h=h, w=w, cp=cp,
                               n_experts=n_experts, nb=nb)
    return pl.pallas_call(
        kernel,
        out_shape=jax.ShapeDtypeStruct((bsz, l, cp), jnp.float32),
        grid=(bsz // nb,),
        in_specs=[
            pl.BlockSpec(memory_space=pltpu.MemorySpace.SMEM),            # routing weights (B, E)
            pl.BlockSpec((nb, h + 2, w + 2, cp), lambda b: (b, 0, 0, 0)),  # bf16 halo of y1
            pl.BlockSpec((n_experts, 10 * cp, cp), lambda b: (0, 0, 0)),   # stacked expert bank
            pl.BlockSpec((1, cp), lambda b: (0, 0)),
            pl.BlockSpec((1, cp), lambda b: (0, 0)),
            pl.BlockSpec((nb, l, cp), lambda b: (b, 0, 0)),                # residual (f32)
        ],
        out_specs=pl.BlockSpec((nb, l, cp), lambda b: (b, 0, 0)),
        compiler_params=pltpu.CompilerParams(
            dimension_semantics=("parallel",),
            vmem_limit_bytes=_vmem_limit_bytes()),
    )(r, y1_halo, wexp, b2, b3, identity)


# ----------------------------- host-side prep (fold BN, pad to 128 lanes) -----------------------------

def bn_fold(gamma, beta, mean, var, eps=1e-5):
    s = gamma / jnp.sqrt(var + eps)
    return s, beta - mean * s


def prepare_params(raw, cin, width, cexp, e, cp=LANE):
    s1, b1 = bn_fold(*raw["bn1"])
    w1 = jnp.transpose(raw["w1"][:, :, 0, 0], (1, 0)) * s1[None, :]          # (Cin, width)
    w1p = jnp.zeros((cp, cp), jnp.float32).at[:cin, :width].set(w1).astype(jnp.bfloat16)
    b1p = jnp.zeros((1, cp), jnp.float32).at[0, :width].set(b1)

    fc_w = jnp.transpose(raw["fc_w"], (1, 0))                                # (width, E)
    fc_wp = jnp.zeros((cp, e), jnp.float32).at[:width].set(fc_w)
    fc_bp = raw["fc_b"].reshape(1, e).astype(jnp.float32)

    s2, b2 = bn_fold(*raw["bn2"])
    # raw we2: (E, out, in, kh, kw) -> (E, kh, kw, in, out); t = kh*3 + kw; BN scale on out.
    w2 = jnp.transpose(raw["we2"], (0, 3, 4, 2, 1)).reshape(e, 9, width, width) * s2
    w2p = jnp.zeros((e, 9, cp, cp), jnp.float32).at[:, :, :width, :width].set(w2)
    w2p = w2p.reshape(e, 9 * cp, cp)
    b2p = jnp.zeros((1, cp), jnp.float32).at[0, :width].set(b2)

    s3, b3 = bn_fold(*raw["bn3"])
    w3 = jnp.transpose(raw["we3"][:, :, :, 0, 0], (0, 2, 1)) * s3            # (E, width, Cexp)
    w3p = jnp.zeros((e, cp, cp), jnp.float32).at[:, :width, :cexp].set(w3)
    b3p = jnp.zeros((1, cp), jnp.float32).at[0, :cexp].set(b3)

    # Stacked per-expert weight bank: rows [0, 9*Cp) = 3x3 taps (t*Cp + ci), rows [9*Cp, 10*Cp) = 1x1.
    wexp = jnp.concatenate([w2p, w3p], axis=1).astype(jnp.bfloat16)          # (E, 10*Cp, Cp)

    return dict(w1=w1p, b1=b1p, fc_w=fc_wp, fc_b=fc_bp,
                wexp=wexp, b2=b2p, b3=b3p, cexp=cexp)


# ----------------------------- forward -----------------------------

def cond_bottleneck_forward(x_nchw, prep, *, l_tile=512):
    cp = LANE
    bsz, cin, h, w = x_nchw.shape
    l = h * w
    cexp = prep["cexp"]
    assert cin == cexp, "down_sample=None requires in_chans == out_chans * expansion"

    x_nhwc = jnp.transpose(x_nchw, (0, 2, 3, 1)).reshape(bsz, l, cin)
    x_pad = jnp.pad(x_nhwc, ((0, 0), (0, 0), (0, cp - cin)))                 # f32 residual path
    x_bf = x_pad.astype(jnp.bfloat16)

    lt = _pick_l_tile(l, l_tile)
    nb_a = _pick_batch_block(bsz, l) if lt == l else 1
    y1, r = conv1_pool_route(x_bf, prep["w1"], prep["b1"], prep["fc_w"], prep["fc_b"],
                             l_tile=lt, batch_block=nb_a)                    # y1 bf16, r f32

    # Single cheap zero-pad of bf16 y1 (no 3-way shifted stack); all 9 taps sliced in-kernel.
    y1_halo = jnp.pad(y1.reshape(bsz, h, w, cp), ((0, 0), (1, 1), (1, 1), (0, 0)))

    nb_b = _pick_batch_block(bsz, l)
    y3 = fused_condconv(r, y1_halo, prep["wexp"], prep["b2"], prep["b3"], x_pad,
                        h=h, w=w, batch_block=nb_b)
    out = y3[:, :, :cexp].reshape(bsz, h, w, cexp)
    return jnp.transpose(out, (0, 3, 1, 2))


# ----------------------------- plain-JAX reference (mirrors kernel casts) -----------------------------

def reference_forward(x_nchw, prep):
    cp = LANE
    bsz, cin, h, w = x_nchw.shape
    l = h * w
    cexp = prep["cexp"]
    f32 = jnp.float32
    hi = jax.lax.Precision.HIGHEST

    x_nhwc = jnp.transpose(x_nchw, (0, 2, 3, 1)).reshape(bsz, l, cin)
    x_pad = jnp.pad(x_nhwc, ((0, 0), (0, 0), (0, cp - cin)))
    xb = x_pad.astype(jnp.bfloat16).astype(f32)

    w1 = prep["w1"].astype(f32)
    y1 = jnp.maximum(jnp.einsum("blc,cd->bld", xb, w1, precision=hi) + prep["b1"], 0.0)
    pooled = y1.mean(axis=1)
    logits = jnp.einsum("bc,ce->be", pooled, prep["fc_w"], precision=hi) + prep["fc_b"]
    r = 1.0 / (1.0 + jnp.exp(-logits))                                       # (B, E) f32

    wexp = prep["wexp"].astype(f32)                                          # (E, 10*Cp, Cp)
    wmix = jnp.einsum("be,eij->bij", r, wexp, precision=hi)                  # f32 expert mix
    w2m = wmix[:, : 9 * cp, :].astype(jnp.bfloat16).astype(f32)
    w3m = wmix[:, 9 * cp:, :].astype(jnp.bfloat16).astype(f32)

    y1b = y1.astype(jnp.bfloat16).astype(f32).reshape(bsz, h, w, cp)
    y1p = jnp.pad(y1b, ((0, 0), (1, 1), (1, 1), (0, 0)))
    patches = jnp.concatenate(
        [y1p[:, p:p + h, q:q + w, :].reshape(bsz, l, cp)
         for p in range(3) for q in range(3)], axis=-1)                      # (B, L, 9*Cp)
    y2 = jnp.maximum(jnp.einsum("blk,bkd->bld", patches, w2m, precision=hi) + prep["b2"], 0.0)
    y2b = y2.astype(jnp.bfloat16).astype(f32)
    y3 = jnp.einsum("blc,bcd->bld", y2b, w3m, precision=hi)
    y3 = jnp.maximum(y3 + prep["b3"] + x_pad, 0.0)

    out = y3[:, :, :cexp].reshape(bsz, h, w, cexp)
    return jnp.transpose(out, (0, 3, 1, 2))


# ----------------------------- main -----------------------------

if __name__ == "__main__":
    # Module config: in_chans=16, out_chans=4, expansion=4 -> out = 16 == in_chans (down_sample=None),
    # width = int(4 * 64/64) * 1 = 4, num_experts = 8, stride=1, groups=1, dilation=1.
    B, Cin, H, W = 2, 16, 16, 16
    out_chans, expansion, E = 4, 4, 8
    width = int(out_chans * (64 / 64)) * 1          # 4
    Cexp = out_chans * expansion                    # 16

    key = jax.random.PRNGKey(0)
    ks = jax.random.split(key, 12)

    def normal(k, shape, scale=0.1):
        return (scale * jax.random.normal(k, shape)).astype(jnp.float32)

    def bn_params(k, c):
        k1, k2, k3, k4 = jax.random.split(k, 4)
        return (1.0 + normal(k1, (c,)), normal(k2, (c,)),
                normal(k3, (c,)), jnp.abs(normal(k4, (c,), 0.5)) + 0.5)

    raw = {
        "w1": normal(ks[0], (width, Cin, 1, 1)),            # Conv2d(in, width, 1) weight
        "bn1": bn_params(ks[1], width),
        "fc_w": normal(ks[2], (E, width)),                  # routing Linear(width, E)
        "fc_b": normal(ks[3], (E,)),
        "we2": normal(ks[4], (E, width, width, 3, 3)),      # CondConv 3x3 experts
        "bn2": bn_params(ks[5], width),
        "we3": normal(ks[6], (E, Cexp, width, 1, 1)),       # CondConv 1x1 experts
        "bn3": bn_params(ks[7], Cexp),
    }
    x = jax.random.normal(ks[8], (B, Cin, H, W), dtype=jnp.float32)

    prep = prepare_params(raw, Cin, width, Cexp, E)

    out = jax.block_until_ready(cond_bottleneck_forward(x, prep))
    ref = jax.block_until_ready(reference_forward(x, prep))

    np.testing.assert_allclose(np.asarray(out), np.asarray(ref), rtol=2e-2, atol=2e-2)
    assert out.shape == (B, Cexp, H, W)
    print("KERNEL_OK")
</pallas_src>

<mosaic_0001>
module attributes {stable_mosaic.version = 11 : i64} {
  func.func @_conv1_pool_route_kernel(%arg0: i32, %arg1: i32, %arg2: memref<2x256x128xbf16, #tpu.memory_space<vmem>>, %arg3: memref<128x128xbf16, #tpu.memory_space<vmem>>, %arg4: memref<1x128xf32, #tpu.memory_space<vmem>>, %arg5: memref<128x8xf32, #tpu.memory_space<vmem>>, %arg6: memref<1x8xf32, #tpu.memory_space<vmem>>, %arg7: memref<2x256x128xbf16, #tpu.memory_space<vmem>>, %arg8: memref<2x1x8xf32, #tpu.memory_space<vmem>>, %arg9: memref<2x128xf32, #tpu.memory_space<vmem>>) attributes {dimension_semantics = [#tpu.dimension_semantics<parallel>, #tpu.dimension_semantics<arbitrary>], iteration_bounds = array<i64: 1, 1>, scalar_prefetch = 0 : i64, scratch_operands = 1 : i64, tpu.core_type = #tpu.core_type<tc>, window_params = [{transform_indices = @transform_0, window_bounds = array<i64: 2, 256, 128>}, {pipeline_mode = #tpu.pipeline_mode<synchronous>, transform_indices = @transform_1, window_bounds = array<i64: 128, 128>}, {pipeline_mode = #tpu.pipeline_mode<synchronous>, transform_indices = @transform_2, window_bounds = array<i64: 1, 128>}, {pipeline_mode = #tpu.pipeline_mode<synchronous>, transform_indices = @transform_3, window_bounds = array<i64: 128, 8>}, {pipeline_mode = #tpu.pipeline_mode<synchronous>, transform_indices = @transform_4, window_bounds = array<i64: 1, 8>}, {transform_indices = @transform_5, window_bounds = array<i64: 2, 256, 128>}, {transform_indices = @transform_6, window_bounds = array<i64: 2, 1, 8>}]} {
    %c0_i32 = arith.constant 0 : i32
    %0 = arith.cmpi eq, %arg1, %c0_i32 : i32
    %1 = arith.extui %0 : i1 to i32
    %c0_i32_0 = arith.constant 0 : i32
    %2 = arith.cmpi ne, %1, %c0_i32_0 : i32
    scf.if %2 {
      %cst_18 = arith.constant 0.000000e+00 : f32
      %22 = vector.broadcast %cst_18 : f32 to vector<2x128xf32>
      %c0_19 = arith.constant 0 : index
      %c0_20 = arith.constant 0 : index
      %23 = vector.load %arg9[%c0_19, %c0_20] : memref<2x128xf32, #tpu.memory_space<vmem>>, vector<2x128xf32>
      tpu.vector_store %arg9[%c0_19, %c0_20], %22 {strides = array<i32>} : memref<2x128xf32, #tpu.memory_space<vmem>>, vector<2x128xf32>,
    } else {
    }
    %c0 = arith.constant 0 : index
    %c0_1 = arith.constant 0 : index
    %c0_2 = arith.constant 0 : index
    %3 = vector.load %arg2[%c0, %c0_1, %c0_2] : memref<2x256x128xbf16, #tpu.memory_space<vmem>>, vector<2x256x128xbf16>
    %4 = vector.shape_cast %3 : vector<2x256x128xbf16> to vector<512x128xbf16>
    %c0_3 = arith.constant 0 : index
    %c0_4 = arith.constant 0 : index
    %5 = vector.load %arg3[%c0_3, %c0_4] : memref<128x128xbf16, #tpu.memory_space<vmem>>, vector<128x128xbf16>
    %cst = arith.constant dense<0.000000e+00> : vector<512x128xf32>
    %6 = tpu.matmul %4, %5, %cst {dimension_numbers = #tpu.dot_dimension_numbers<[1], [0], [0], [1], [0, 0, 1, 1], [], []>} : vector<512x128xbf16>, vector<128x128xbf16>, vector<512x128xf32> -> vector<512x128xf32>
    %c0_5 = arith.constant 0 : index
    %c0_6 = arith.constant 0 : index
    %7 = vector.load %arg4[%c0_5, %c0_6] : memref<1x128xf32, #tpu.memory_space<vmem>>, vector<1x128xf32>
    %8 = vector.broadcast %7 : vector<1x128xf32> to vector<512x128xf32>
    %9 = arith.addf %6, %8 : vector<512x128xf32>
    %cst_7 = arith.constant 0.000000e+00 : f32
    %10 = vector.broadcast %cst_7 : f32 to vector<512x128xf32>
    %11 = arith.maximumf %9, %10 : vector<512x128xf32>
    %12 = vector.shape_cast %11 : vector<512x128xf32> to vector<2x256x128xf32>
    %13 = arith.truncf %12 : vector<2x256x128xf32> to vector<2x256x128xbf16>
    %c0_8 = arith.constant 0 : index
    %c0_9 = arith.constant 0 : index
    %c0_10 = arith.constant 0 : index
    %14 = vector.load %arg7[%c0_8, %c0_9, %c0_10] : memref<2x256x128xbf16, #tpu.memory_space<vmem>>, vector<2x256x128xbf16>
    tpu.vector_store %arg7[%c0_8, %c0_9, %c0_10], %13 {strides = array<i32>} : memref<2x256x128xbf16, #tpu.memory_space<vmem>>, vector<2x256x128xbf16>,
    %c0_11 = arith.constant 0 : index
    %c0_12 = arith.constant 0 : index
    %15 = vector.load %arg9[%c0_11, %c0_12] : memref<2x128xf32, #tpu.memory_space<vmem>>, vector<2x128xf32>
    %cst_13 = arith.constant dense<0.000000e+00> : vector<2x128xf32>
    %16 = vector.multi_reduction <add>, %12, %cst_13 [1] : vector<2x256x128xf32> to vector<2x128xf32>
    %17 = arith.addf %15, %16 : vector<2x128xf32>
    %c0_14 = arith.constant 0 : index
    %c0_15 = arith.constant 0 : index
    %18 = vector.load %arg9[%c0_14, %c0_15] : memref<2x128xf32, #tpu.memory_space<vmem>>, vector<2x128xf32>
    tpu.vector_store %arg9[%c0_14, %c0_15], %17 {strides = array<i32>} : memref<2x128xf32, #tpu.memory_space<vmem>>, vector<2x128xf32>,
    %c0_i32_16 = arith.constant 0 : i32
    %19 = arith.cmpi eq, %arg1, %c0_i32_16 : i32
    %20 = arith.extui %19 : i1 to i32
    %c0_i32_17 = arith.constant 0 : i32
    %21 = arith.cmpi ne, %20, %c0_i32_17 : i32
    scf.if %21 {
      %c0_18 = arith.constant 0 : index
      %c0_19 = arith.constant 0 : index
      %22 = vector.load %arg9[%c0_18, %c0_19] : memref<2x128xf32, #tpu.memory_space<vmem>>, vector<2x128xf32>
      %cst_20 = arith.constant 3.906250e-03 : f32
      %23 = vector.broadcast %cst_20 : f32 to vector<2x128xf32>
      %24 = arith.mulf %22, %23 : vector<2x128xf32>
      %c0_21 = arith.constant 0 : index
      %c0_22 = arith.constant 0 : index
      %25 = vector.load %arg5[%c0_21, %c0_22] : memref<128x8xf32, #tpu.memory_space<vmem>>, vector<128x8xf32>
      %cst_23 = arith.constant dense<0.000000e+00> : vector<2x8xf32>
      %26 = tpu.matmul %24, %25, %cst_23 {dimension_numbers = #tpu.dot_dimension_numbers<[1], [0], [0], [1], [0, 0, 1, 1], [], []>} : vector<2x128xf32>, vector<128x8xf32>, vector<2x8xf32> -> vector<2x8xf32>
      %c0_24 = arith.constant 0 : index
      %c0_25 = arith.constant 0 : index
      %27 = vector.load %arg6[%c0_24, %c0_25] : memref<1x8xf32, #tpu.memory_space<vmem>>, vector<1x8xf32>
      %28 = vector.broadcast %27 : vector<1x8xf32> to vector<2x8xf32>
      %29 = arith.addf %26, %28 : vector<2x8xf32>
      %cst_26 = arith.constant 0.000000e+00 : f32
      %30 = vector.broadcast %cst_26 : f32 to vector<2x8xf32>
      %31 = arith.subf %30, %29 : vector<2x8xf32>
      %32 = math.exp %31 : vector<2x8xf32>
      %cst_27 = arith.constant 1.000000e+00 : f32
      %33 = vector.broadcast %cst_27 : f32 to vector<2x8xf32>
      %34 = arith.addf %33, %32 : vector<2x8xf32>
      %cst_28 = arith.constant 1.000000e+00 : f32
      %35 = vector.broadcast %cst_28 : f32 to vector<2x8xf32>
      %36 = arith.divf %35, %34 : vector<2x8xf32>
      %37 = vector.shape_cast %36 : vector<2x8xf32> to vector<2x1x8xf32>
      %c0_29 = arith.constant 0 : index
      %c0_30 = arith.constant 0 : index
      %c0_31 = arith.constant 0 : index
      %38 = vector.load %arg8[%c0_29, %c0_30, %c0_31] : memref<2x1x8xf32, #tpu.memory_space<vmem>>, vector<2x1x8xf32>
      tpu.vector_store %arg8[%c0_29, %c0_30, %c0_31], %37 {strides = array<i32>} : memref<2x1x8xf32, #tpu.memory_space<vmem>>, vector<2x1x8xf32>,
    } else {
    }
    return
  }
  func.func @transform_0(%arg0: i32, %arg1: i32) -> (i32, i32, i32) {
    %c0_i32 = arith.constant 0 : i32
    %c0_i32_0 = arith.constant 0 : i32
    return %arg0, %arg1, %c0_i32 : i32, i32, i32
  }
  func.func @transform_1(%arg0: i32, %arg1: i32) -> (i32, i32) {
    %c0_i32 = arith.constant 0 : i32
    %c0_i32_0 = arith.constant 0 : i32
    %c0_i32_1 = arith.constant 0 : i32
    return %c0_i32, %c0_i32_0 : i32, i32
  }
  func.func @transform_2(%arg0: i32, %arg1: i32) -> (i32, i32) {
    %c0_i32 = arith.constant 0 : i32
    %c0_i32_0 = arith.constant 0 : i32
    %c0_i32_1 = arith.constant 0 : i32
    return %c0_i32, %c0_i32_0 : i32, i32
  }
  func.func @transform_3(%arg0: i32, %arg1: i32) -> (i32, i32) {
    %c0_i32 = arith.constant 0 : i32
    %c0_i32_0 = arith.constant 0 : i32
    %c0_i32_1 = arith.constant 0 : i32
    return %c0_i32, %c0_i32_0 : i32, i32
  }
  func.func @transform_4(%arg0: i32, %arg1: i32) -> (i32, i32) {
    %c0_i32 = arith.constant 0 : i32
    %c0_i32_0 = arith.constant 0 : i32
    %c0_i32_1 = arith.constant 0 : i32
    return %c0_i32, %c0_i32_0 : i32, i32
  }
  func.func @transform_5(%arg0: i32, %arg1: i32) -> (i32, i32, i32) {
    %c0_i32 = arith.constant 0 : i32
    %c0_i32_0 = arith.constant 0 : i32
    return %arg0, %arg1, %c0_i32 : i32, i32, i32
  }
  func.func @transform_6(%arg0: i32, %arg1: i32) -> (i32, i32, i32) {
    %c0_i32 = arith.constant 0 : i32
    %c0_i32_0 = arith.constant 0 : i32
    %c0_i32_1 = arith.constant 0 : i32
    return %arg0, %c0_i32, %c0_i32_0 : i32, i32, i32
  }
}

</mosaic_0001>

<llo_original>
// kernel: tpu_custom_call.1
$region0: #{tpu_custom_call.1}
  #allocation0 [shape = 'u32[]', space=smem, size = 0x4, offset = 0x4, fixed_abs, tag = 'smem constant byte address 0x4 - core index']
  #allocation1 [shape = 'u32[72,128]{1,0:T(1,128)}', space=vmem, size = 0x9000, scoped, tag = 'internal scratch']
  #allocation2 [shape = 'f32[2,128]{1,0:T(2,128)}', space=vmem, size = 0x400, scoped, tag = 'scratch operand']
  %s0 = inlined_call_operand.hbm [shape: bf16[2,256,128], index: 0, kind: input, shape index: {}]
  %s1 = inlined_call_operand.vmem [shape: bf16[128,128], index: 1, kind: input, shape index: {}]
  %s2 = inlined_call_operand.vmem [shape: f32[1,128], index: 2, kind: input, shape index: {}]
  %s3 = inlined_call_operand.vmem [shape: f32[128,8], index: 3, kind: input, shape index: {}]
  %s4 = inlined_call_operand.vmem [shape: f32[1,8], index: 4, kind: input, shape index: {}]
  %s5 = inlined_call_operand.hbm [shape: bf16[2,256,128], index: 5, kind: output, shape index: {0}]
  %s6 = inlined_call_operand.hbm [shape: f32[2,1,8], index: 6, kind: output, shape index: {1}]
  %7 = xla_tuple %s5, %s6
  %s8 = sld [smem:[#allocation0]]
  $region50: #{tpu_custom_call.1} parent=0
    _
  %s10 = ssub.s32 1, %s8
  %s11 = scalar_select 0, %s10, %s8
  $region1: #{tpu_custom_call.1} parent=0
    #allocation3 [shape = 'u8[131072]{0}', space=vmem, size = 0x20000, scoped, tag = 'input window, operand 0, single buffered']
    #allocation4 [shape = 's32[1]{0}', space=sflag, size = 0x4, scoped, tag = 'scoped memory for tpu_custom_call.1']
    #allocation5 [shape = 's32[1]{0}', space=sflag, size = 0x4, scoped, tag = 'scoped memory for tpu_custom_call.1']
    #allocation6 [shape = 'u8[131072]{0}', space=vmem, size = 0x20000, scoped, tag = 'output window, operand 0, single buffered']
    #allocation7 [shape = 'u8[1024]{0}', space=vmem, size = 0x400, scoped, tag = 'output window, operand 1, single buffered']
    #allocation8 [shape = 's32[1]{0}', space=sflag, size = 0x4, scoped, tag = 'scoped memory for tpu_custom_call.1']
    %12 = vsyncpa [#allocation4], 0
    %13 = vsyncpa [#allocation5], 0
    %14 = vsyncpa [#allocation8], 0
    // Predicated region
    $region2: #{tpu_custom_call.1} parent=1 // pred_check
      _
    $region3: #{tpu_custom_call.1} parent=1 // pred_check_branch
      %16 = sbr.rel (0) target = $region5
    $region4: #{tpu_custom_call.1} parent=1 // pred_region
      %18 = vsyncadd [#allocation4], 0
      %s19 = sshll.u32 %s0, 4
      %s20 = int_to_ptr.hbm [resolvable:$true] %s19
      %s21 = sshll.u32 [#allocation3], 4
      %s22 = int_to_ptr.vmem [resolvable:$true] %s21
      %27 = dma.hbm_to_vmem [thread:$0]  %s20, 4096, %s22, [#allocation4], 64, 64, 4
    $region5: #{tpu_custom_call.1} parent=1 // pred_fallthru
      _
    // Predicated region
    $region6: #{tpu_custom_call.1} parent=1 // pred_check
      _
    $region7: #{tpu_custom_call.1} parent=1 // pred_check_branch
      %29 = sbr.rel (0) target = $region9
    $region8: #{tpu_custom_call.1} parent=1 // pred_region
      _
    $region9: #{tpu_custom_call.1} parent=1 // pred_fallthru
      _
    // Predicated region
    $region10: #{tpu_custom_call.1} parent=1 // pred_check
      _
    $region11: #{tpu_custom_call.1} parent=1 // pred_check_branch
      %31 = sbr.rel (0) target = $region13
    $region12: #{tpu_custom_call.1} parent=1 // pred_region
      _
    $region13: #{tpu_custom_call.1} parent=1 // pred_fallthru
      _
    // Predicated region
    $region14: #{tpu_custom_call.1} parent=1 // pred_check
      _
    $region15: #{tpu_custom_call.1} parent=1 // pred_check_branch
      %33 = sbr.rel (0) target = $region17
    $region16: #{tpu_custom_call.1} parent=1 // pred_region
      _
    $region17: #{tpu_custom_call.1} parent=1 // pred_fallthru
      _
    // Predicated region
    $region18: #{tpu_custom_call.1} parent=1 // pred_check
      _
    $region19: #{tpu_custom_call.1} parent=1 // pred_check_branch
      %35 = sbr.rel (0) target = $region21
    $region20: #{tpu_custom_call.1} parent=1 // pred_region
      _
    $region21: #{tpu_custom_call.1} parent=1 // pred_fallthru
      _
    // Predicated region
    $region22: #{tpu_custom_call.1} parent=1 // pred_check
      _
    $region23: #{tpu_custom_call.1} parent=1 // pred_check_branch
      %37 = sbr.rel (0) target = $region25
    $region24: #{tpu_custom_call.1} parent=1 // pred_region
      %39 = dma.done [#allocation4], 4096
    $region25: #{tpu_custom_call.1} parent=1 // pred_fallthru
      _
    %p40 = scmp.eq.s32.totalorder 0, 0
    // Predicated region
    $region26: #{tpu_custom_call.1} parent=1 // pred_check
      %p41 = pneg %p40
    $region27: #{tpu_custom_call.1} parent=1 // pred_check_branch
      %43 = sbr.rel (%p41) target = $region29
    $region28: #{tpu_custom_call.1} parent=1 // pred_region
      %44 = vst [vmem:[#allocation2] sm:$0x3] 0.0
    $region29: #{tpu_custom_call.1} parent=1 // pred_fallthru
      _
    %v45 = vld [vmem:[#allocation3] sm:$0xf]
    %v46 = vld [vmem:[#allocation3 + $0x4] sm:$0xf]
    %v47 = vld [vmem:[#allocation3 + $0x8] sm:$0xf]
    %v48 = vld [vmem:[#allocation3 + $0xc] sm:$0xf]
    %v49 = vld [vmem:[#allocation3 + $0x10] sm:$0xf]
    %v50 = vld [vmem:[#allocation3 + $0x14] sm:$0xf]
    %v51 = vld [vmem:[#allocation3 + $0x18] sm:$0xf]
    %v52 = vld [vmem:[#allocation3 + $0x1c] sm:$0xf]
    %v53 = vld [vmem:[#allocation3 + $0x20] sm:$0xf]
    %v54 = vld [vmem:[#allocation3 + $0x24] sm:$0xf]
    %v55 = vld [vmem:[#allocation3 + $0x28] sm:$0xf]
    %v56 = vld [vmem:[#allocation3 + $0x2c] sm:$0xf]
    %v57 = vld [vmem:[#allocation3 + $0x30] sm:$0xf]
    %v58 = vld [vmem:[#allocation3 + $0x34] sm:$0xf]
    %v59 = vld [vmem:[#allocation3 + $0x38] sm:$0xf]
    %v60 = vld [vmem:[#allocation3 + $0x3c] sm:$0xf]
    %v61 = vld [vmem:[#allocation3 + $0x40] sm:$0xf]
    %v62 = vld [vmem:[#allocation3 + $0x44] sm:$0xf]
    %v63 = vld [vmem:[#allocation3 + $0x48] sm:$0xf]
    %v64 = vld [vmem:[#allocation3 + $0x4c] sm:$0xf]
    %v65 = vld [vmem:[#allocation3 + $0x50] sm:$0xf]
    %v66 = vld [vmem:[#allocation3 + $0x54] sm:$0xf]
    %v67 = vld [vmem:[#allocation3 + $0x58] sm:$0xf]
    %v68 = vld [vmem:[#allocation3 + $0x5c] sm:$0xf]
    %v69 = vld [vmem:[#allocation3 + $0x60] sm:$0xf]
    %v70 = vld [vmem:[#allocation3 + $0x64] sm:$0xf]
    %v71 = vld [vmem:[#allocation3 + $0x68] sm:$0xf]
    %v72 = vld [vmem:[#allocation3 + $0x6c] sm:$0xf]
    %v73 = vld [vmem:[#allocation3 + $0x70] sm:$0xf]
    %v74 = vld [vmem:[#allocation3 + $0x74] sm:$0xf]
    %v75 = vld [vmem:[#allocation3 + $0x78] sm:$0xf]
    %v76 = vld [vmem:[#allocation3 + $0x7c] sm:$0xf]
    %v77 = vld [vmem:[#allocation3 + $0x80] sm:$0xf]
    %v78 = vld [vmem:[#allocation3 + $0x84] sm:$0xf]
    %v79 = vld [vmem:[#allocation3 + $0x88] sm:$0xf]
    %v80 = vld [vmem:[#allocation3 + $0x8c] sm:$0xf]
    %v81 = vld [vmem:[#allocation3 + $0x90] sm:$0xf]
    %v82 = vld [vmem:[#allocation3 + $0x94] sm:$0xf]
    %v83 = vld [vmem:[#allocation3 + $0x98] sm:$0xf]
    %v84 = vld [vmem:[#allocation3 + $0x9c] sm:$0xf]
    %v85 = vld [vmem:[#allocation3 + $0xa0] sm:$0xf]
    %v86 = vld [vmem:[#allocation3 + $0xa4] sm:$0xf]
    %v87 = vld [vmem:[#allocation3 + $0xa8] sm:$0xf]
    %v88 = vld [vmem:[#allocation3 + $0xac] sm:$0xf]
    %v89 = vld [vmem:[#allocation3 + $0xb0] sm:$0xf]
    %v90 = vld [vmem:[#allocation3 + $0xb4] sm:$0xf]
    %v91 = vld [vmem:[#allocation3 + $0xb8] sm:$0xf]
    %v92 = vld [vmem:[#allocation3 + $0xbc] sm:$0xf]
    %v93 = vld [vmem:[#allocation3 + $0xc0] sm:$0xf]
    %v94 = vld [vmem:[#allocation3 + $0xc4] sm:$0xf]
    %v95 = vld [vmem:[#allocation3 + $0xc8] sm:$0xf]
    %v96 = vld [vmem:[#allocation3 + $0xcc] sm:$0xf]
    %v97 = vld [vmem:[#allocation3 + $0xd0] sm:$0xf]
    %v98 = vld [vmem:[#allocation3 + $0xd4] sm:$0xf]
    %v99 = vld [vmem:[#allocation3 + $0xd8] sm:$0xf]
    %v100 = vld [vmem:[#allocation3 + $0xdc] sm:$0xf]
    %v101 = vld [vmem:[#allocation3 + $0xe0] sm:$0xf]
    %v102 = vld [vmem:[#allocation3 + $0xe4] sm:$0xf]
    %v103 = vld [vmem:[#allocation3 + $0xe8] sm:$0xf]
    %v104 = vld [vmem:[#allocation3 + $0xec] sm:$0xf]
    %v105 = vld [vmem:[#allocation3 + $0xf0] sm:$0xf]
    %v106 = vld [vmem:[#allocation3 + $0xf4] sm:$0xf]
    %v107 = vld [vmem:[#allocation3 + $0xf8] sm:$0xf]
    %v108 = vld [vmem:[#allocation3 + $0xfc] sm:$0xf]
    %v109 = vld [vmem:[%s1] sm:$0xf]
    %v110 = vld [vmem:[%s1 + $0x4] sm:$0xf]
    %v111 = vld [vmem:[%s1 + $0x8] sm:$0xf]
    %v112 = vld [vmem:[%s1 + $0xc] sm:$0xf]
    %v113 = vld [vmem:[%s1 + $0x10] sm:$0xf]
    %v114 = vld [vmem:[%s1 + $0x14] sm:$0xf]
    %v115 = vld [vmem:[%s1 + $0x18] sm:$0xf]
    %v116 = vld [vmem:[%s1 + $0x1c] sm:$0xf]
    %v117 = vld [vmem:[%s1 + $0x20] sm:$0xf]
    %v118 = vld [vmem:[%s1 + $0x24] sm:$0xf]
    %v119 = vld [vmem:[%s1 + $0x28] sm:$0xf]
    %v120 = vld [vmem:[%s1 + $0x2c] sm:$0xf]
    %v121 = vld [vmem:[%s1 + $0x30] sm:$0xf]
    %v122 = vld [vmem:[%s1 + $0x34] sm:$0xf]
    %v123 = vld [vmem:[%s1 + $0x38] sm:$0xf]
    %v124 = vld [vmem:[%s1 + $0x3c] sm:$0xf]
    %v125 = vld [vmem:[%s2] sm:$0x1]
    %v127 = vperm.slane %v125, 0
    %v193 = vunpack.c.l.b16 %v45
    %v194 = vunpack.c.l.b16 %v46
    %v195 = vunpack.c.l.b16 %v47
    %v196 = vunpack.c.l.b16 %v48
    %v197 = vunpack.c.l.b16 %v49
    %v198 = vunpack.c.l.b16 %v50
    %v199 = vunpack.c.l.b16 %v51
    %v200 = vunpack.c.l.b16 %v52
    %v201 = vunpack.c.l.b16 %v53
    %v202 = vunpack.c.l.b16 %v54
    %v203 = vunpack.c.l.b16 %v55
    %v204 = vunpack.c.l.b16 %v56
    %v205 = vunpack.c.l.b16 %v57
    %v206 = vunpack.c.l.b16 %v58
    %v207 = vunpack.c.l.b16 %v59
    %v208 = vunpack.c.l.b16 %v60
    %v209 = vunpack.c.l.b16 %v61
    %v210 = vunpack.c.l.b16 %v62
    %v211 = vunpack.c.l.b16 %v63
    %v212 = vunpack.c.l.b16 %v64
    %v213 = vunpack.c.l.b16 %v65
    %v214 = vunpack.c.l.b16 %v66
    %v215 = vunpack.c.l.b16 %v67
    %v216 = vunpack.c.l.b16 %v68
    %v217 = vunpack.c.l.b16 %v69
    %v218 = vunpack.c.l.b16 %v70
    %v219 = vunpack.c.l.b16 %v71
    %v220 = vunpack.c.l.b16 %v72
    %v221 = vunpack.c.l.b16 %v73
    %v222 = vunpack.c.l.b16 %v74
    %v223 = vunpack.c.l.b16 %v75
    %v224 = vunpack.c.l.b16 %v76
    %v225 = vunpack.c.l.b16 %v77
    %v226 = vunpack.c.l.b16 %v78
    %v227 = vunpack.c.l.b16 %v79
    %v228 = vunpack.c.l.b16 %v80
    %v229 = vunpack.c.l.b16 %v81
    %v230 = vunpack.c.l.b16 %v82
    %v231 = vunpack.c.l.b16 %v83
    %v232 = vunpack.c.l.b16 %v84
    %v233 = vunpack.c.l.b16 %v85
    %v234 = vunpack.c.l.b16 %v86
    %v235 = vunpack.c.l.b16 %v87
    %v236 = vunpack.c.l.b16 %v88
    %v237 = vunpack.c.l.b16 %v89
    %v238 = vunpack.c.l.b16 %v90
    %v239 = vunpack.c.l.b16 %v91
    %v240 = vunpack.c.l.b16 %v92
    %v241 = vunpack.c.l.b16 %v93
    %v242 = vunpack.c.l.b16 %v94
    %v243 = vunpack.c.l.b16 %v95
    %v244 = vunpack.c.l.b16 %v96
    %v245 = vunpack.c.l.b16 %v97
    %v246 = vunpack.c.l.b16 %v98
    %v247 = vunpack.c.l.b16 %v99
    %v248 = vunpack.c.l.b16 %v100
    %v249 = vunpack.c.l.b16 %v101
    %v250 = vunpack.c.l.b16 %v102
    %v251 = vunpack.c.l.b16 %v103
    %v252 = vunpack.c.l.b16 %v104
    %v253 = vunpack.c.l.b16 %v105
    %v254 = vunpack.c.l.b16 %v106
    %v255 = vunpack.c.l.b16 %v107
    %v256 = vunpack.c.l.b16 %v108
    %v257 = vpack.c.b16 %v194, %v193
    %v258 = vpack.c.b16 %v196, %v195
    %v259 = vpack.c.b16 %v198, %v197
    %v260 = vpack.c.b16 %v200, %v199
    %v261 = vpack.c.b16 %v202, %v201
    %v262 = vpack.c.b16 %v204, %v203
    %v263 = vpack.c.b16 %v206, %v205
    %v264 = vpack.c.b16 %v208, %v207
    %v265 = vpack.c.b16 %v210, %v209
    %v266 = vpack.c.b16 %v212, %v211
    %v267 = vpack.c.b16 %v214, %v213
    %v268 = vpack.c.b16 %v216, %v215
    %v269 = vpack.c.b16 %v218, %v217
    %v270 = vpack.c.b16 %v220, %v219
    %v271 = vpack.c.b16 %v222, %v221
    %v272 = vpack.c.b16 %v224, %v223
    %v273 = vpack.c.b16 %v226, %v225
    %v274 = vpack.c.b16 %v228, %v227
    %v275 = vpack.c.b16 %v230, %v229
    %v276 = vpack.c.b16 %v232, %v231
    %v277 = vpack.c.b16 %v234, %v233
    %v278 = vpack.c.b16 %v236, %v235
    %v279 = vpack.c.b16 %v238, %v237
    %v280 = vpack.c.b16 %v240, %v239
    %v281 = vpack.c.b16 %v242, %v241
    %v282 = vpack.c.b16 %v244, %v243
    %v283 = vpack.c.b16 %v246, %v245
    %v284 = vpack.c.b16 %v248, %v247
    %v285 = vpack.c.b16 %v250, %v249
    %v286 = vpack.c.b16 %v252, %v251
    %v287 = vpack.c.b16 %v254, %v253
    %v288 = vpack.c.b16 %v256, %v255
    %v337 = vunpack.c.l.b16 %v109
    %v338 = vunpack.c.l.b16 %v110
    %v339 = vunpack.c.l.b16 %v111
    %v340 = vunpack.c.l.b16 %v112
    %v341 = vunpack.c.l.b16 %v113
    %v342 = vunpack.c.l.b16 %v114
    %v343 = vunpack.c.l.b16 %v115
    %v344 = vunpack.c.l.b16 %v116
    %v345 = vunpack.c.l.b16 %v117
    %v346 = vunpack.c.l.b16 %v118
    %v347 = vunpack.c.l.b16 %v119
    %v348 = vunpack.c.l.b16 %v120
    %v349 = vunpack.c.l.b16 %v121
    %v350 = vunpack.c.l.b16 %v122
    %v351 = vunpack.c.l.b16 %v123
    %v352 = vunpack.c.l.b16 %v124
    %v353 = vpack.c.b16 %v338, %v337
    %v354 = vpack.c.b16 %v340, %v339
    %v355 = vpack.c.b16 %v342, %v341
    %v356 = vpack.c.b16 %v344, %v343
    %v357 = vpack.c.b16 %v346, %v345
    %v358 = vpack.c.b16 %v348, %v347
    %v359 = vpack.c.b16 %v350, %v349
    %v360 = vpack.c.b16 %v352, %v351
    %369 = vmatpush.bf16.msra.mxu0 %v360
    %370 = vmatpush.bf16.msra.mxu0 %v359
    %371 = vmatpush.bf16.msra.mxu0 %v358
    %372 = vmatpush.bf16.msra.mxu0 %v357
    %373 = vmatpush.bf16.msra.mxu0 %v356
    %374 = vmatpush.bf16.msra.mxu0 %v355
    %375 = vmatpush.bf16.msra.mxu0 %v354
    %376 = vmatpush.bf16.msra.mxu0 %v353
    %377 = vmatmul.bf16.gmra.mxu0 %v257
    %v378 = vpop.f32.mrf.mxu0
    %v379 = vadd.f32 %v127, %v378
    %v380 = vpop.f32.mrf.mxu0
    %v381 = vadd.f32 %v127, %v380
    %382 = vmatmul.bf16.gmra.mxu0 %v258
    %v383 = vpop.f32.mrf.mxu0
    %v384 = vadd.f32 %v127, %v383
    %v385 = vpop.f32.mrf.mxu0
    %v386 = vadd.f32 %v127, %v385
    %387 = vmatmul.bf16.gmra.mxu0 %v259
    %v388 = vpop.f32.mrf.mxu0
    %v389 = vadd.f32 %v127, %v388
    %v390 = vpop.f32.mrf.mxu0
    %v391 = vadd.f32 %v127, %v390
    %392 = vmatmul.bf16.gmra.mxu0 %v260
    %v393 = vpop.f32.mrf.mxu0
    %v394 = vadd.f32 %v127, %v393
    %v395 = vpop.f32.mrf.mxu0
    %v396 = vadd.f32 %v127, %v395
    %397 = vmatmul.bf16.gmra.mxu0 %v261
    %v398 = vpop.f32.mrf.mxu0
    %v399 = vadd.f32 %v127, %v398
    %v400 = vpop.f32.mrf.mxu0
    %v401 = vadd.f32 %v127, %v400
    %402 = vmatmul.bf16.gmra.mxu0 %v262
    %v403 = vpop.f32.mrf.mxu0
    %v404 = vadd.f32 %v127, %v403
    %v405 = vpop.f32.mrf.mxu0
    %v406 = vadd.f32 %v127, %v405
    %407 = vmatmul.bf16.gmra.mxu0 %v263
    %v408 = vpop.f32.mrf.mxu0
    %v409 = vadd.f32 %v127, %v408
    %v410 = vpop.f32.mrf.mxu0
    %v411 = vadd.f32 %v127, %v410
    %412 = vmatmul.bf16.gmra.mxu0 %v264
    %v413 = vpop.f32.mrf.mxu0
    %v414 = vadd.f32 %v127, %v413
    %v415 = vpop.f32.mrf.mxu0
    %v416 = vadd.f32 %v127, %v415
    %417 = vmatmul.bf16.gmra.mxu0 %v265
    %v418 = vpop.f32.mrf.mxu0
    %v419 = vadd.f32 %v127, %v418
    %v420 = vpop.f32.mrf.mxu0
    %v421 = vadd.f32 %v127, %v420
    %422 = vmatmul.bf16.gmra.mxu0 %v266
    %v423 = vpop.f32.mrf.mxu0
    %v424 = vadd.f32 %v127, %v423
    %v425 = vpop.f32.mrf.mxu0
    %v426 = vadd.f32 %v127, %v425
    %427 = vmatmul.bf16.gmra.mxu0 %v267
    %v428 = vpop.f32.mrf.mxu0
    %v429 = vadd.f32 %v127, %v428
    %v430 = vpop.f32.mrf.mxu0
    %v431 = vadd.f32 %v127, %v430
    %432 = vmatmul.bf16.gmra.mxu0 %v268
    %v433 = vpop.f32.mrf.mxu0
    %v434 = vadd.f32 %v127, %v433
    %v435 = vpop.f32.mrf.mxu0
    %v436 = vadd.f32 %v127, %v435
    %437 = vmatmul.bf16.gmra.mxu0 %v269
    %v438 = vpop.f32.mrf.mxu0
    %v439 = vadd.f32 %v127, %v438
    %v440 = vpop.f32.mrf.mxu0
    %v441 = vadd.f32 %v127, %v440
    %442 = vmatmul.bf16.gmra.mxu0 %v270
    %v443 = vpop.f32.mrf.mxu0
    %v444 = vadd.f32 %v127, %v443
    %v445 = vpop.f32.mrf.mxu0
    %v446 = vadd.f32 %v127, %v445
    %447 = vmatmul.bf16.gmra.mxu0 %v271
    %v448 = vpop.f32.mrf.mxu0
    %v449 = vadd.f32 %v127, %v448
    %v450 = vpop.f32.mrf.mxu0
    %v451 = vadd.f32 %v127, %v450
    %452 = vmatmul.bf16.gmra.mxu0 %v272
    %v453 = vpop.f32.mrf.mxu0
    %v454 = vadd.f32 %v127, %v453
    %v455 = vpop.f32.mrf.mxu0
    %v456 = vadd.f32 %v127, %v455
    %457 = vmatmul.bf16.gmra.mxu0 %v273
    %v458 = vpop.f32.mrf.mxu0
    %v459 = vadd.f32 %v127, %v458
    %v460 = vpop.f32.mrf.mxu0
    %v461 = vadd.f32 %v127, %v460
    %462 = vmatmul.bf16.gmra.mxu0 %v274
    %v463 = vpop.f32.mrf.mxu0
    %v464 = vadd.f32 %v127, %v463
    %v465 = vpop.f32.mrf.mxu0
    %v466 = vadd.f32 %v127, %v465
    %467 = vmatmul.bf16.gmra.mxu0 %v275
    %v468 = vpop.f32.mrf.mxu0
    %v469 = vadd.f32 %v127, %v468
    %v470 = vpop.f32.mrf.mxu0
    %v471 = vadd.f32 %v127, %v470
    %472 = vmatmul.bf16.gmra.mxu0 %v276
    %v473 = vpop.f32.mrf.mxu0
    %v474 = vadd.f32 %v127, %v473
    %v475 = vpop.f32.mrf.mxu0
    %v476 = vadd.f32 %v127, %v475
    %477 = vmatmul.bf16.gmra.mxu0 %v277
    %v478 = vpop.f32.mrf.mxu0
    %v479 = vadd.f32 %v127, %v478
    %v480 = vpop.f32.mrf.mxu0
    %v481 = vadd.f32 %v127, %v480
    %482 = vmatmul.bf16.gmra.mxu0 %v278
    %v483 = vpop.f32.mrf.mxu0
    %v484 = vadd.f32 %v127, %v483
    %v485 = vpop.f32.mrf.mxu0
    %v486 = vadd.f32 %v127, %v485
    %487 = vmatmul.bf16.gmra.mxu0 %v279
    %v488 = vpop.f32.mrf.mxu0
    %v489 = vadd.f32 %v127, %v488
    %v490 = vpop.f32.mrf.mxu0
    %v491 = vadd.f32 %v127, %v490
    %492 = vmatmul.bf16.gmra.mxu0 %v280
    %v493 = vpop.f32.mrf.mxu0
    %v494 = vadd.f32 %v127, %v493
    %v495 = vpop.f32.mrf.mxu0
    %v496 = vadd.f32 %v127, %v495
    %497 = vmatmul.bf16.gmra.mxu0 %v281
    %v498 = vpop.f32.mrf.mxu0
    %v499 = vadd.f32 %v127, %v498
    %v500 = vpop.f32.mrf.mxu0
    %v501 = vadd.f32 %v127, %v500
    %502 = vmatmul.bf16.gmra.mxu0 %v282
    %v503 = vpop.f32.mrf.mxu0
    %v504 = vadd.f32 %v127, %v503
    %v505 = vpop.f32.mrf.mxu0
    %v506 = vadd.f32 %v127, %v505
    %507 = vmatmul.bf16.gmra.mxu0 %v283
    %v508 = vpop.f32.mrf.mxu0
    %v509 = vadd.f32 %v127, %v508
    %v510 = vpop.f32.mrf.mxu0
    %v511 = vadd.f32 %v127, %v510
    %512 = vmatmul.bf16.gmra.mxu0 %v284
    %v513 = vpop.f32.mrf.mxu0
    %v514 = vadd.f32 %v127, %v513
    %v515 = vpop.f32.mrf.mxu0
    %v516 = vadd.f32 %v127, %v515
    %517 = vmatmul.bf16.gmra.mxu0 %v285
    %v518 = vpop.f32.mrf.mxu0
    %v519 = vadd.f32 %v127, %v518
    %v520 = vpop.f32.mrf.mxu0
    %v521 = vadd.f32 %v127, %v520
    %522 = vmatmul.bf16.gmra.mxu0 %v286
    %v523 = vpop.f32.mrf.mxu0
    %v524 = vadd.f32 %v127, %v523
    %v525 = vpop.f32.mrf.mxu0
    %v526 = vadd.f32 %v127, %v525
    %527 = vmatmul.bf16.gmra.mxu0 %v287
    %v528 = vpop.f32.mrf.mxu0
    %v529 = vadd.f32 %v127, %v528
    %v530 = vpop.f32.mrf.mxu0
    %v531 = vadd.f32 %v127, %v530
    %532 = vmatmul.bf16.gmra.mxu0 %v288
    %v533 = vpop.f32.mrf.mxu0
    %v534 = vadd.f32 %v127, %v533
    %v535 = vpop.f32.mrf.mxu0
    %v536 = vadd.f32 %v127, %v535
    %537 = vdwg.mxu0
    %v538 = vmax.f32 %v379, 0.0
    %v539 = vmax.f32 %v381, 0.0
    %v540 = vmax.f32 %v384, 0.0
    %v541 = vmax.f32 %v386, 0.0
    %v542 = vmax.f32 %v389, 0.0
    %v543 = vmax.f32 %v391, 0.0
    %v544 = vmax.f32 %v394, 0.0
    %v545 = vmax.f32 %v396, 0.0
    %v546 = vmax.f32 %v399, 0.0
    %v547 = vmax.f32 %v401, 0.0
    %v548 = vmax.f32 %v404, 0.0
    %v549 = vmax.f32 %v406, 0.0
    %v550 = vmax.f32 %v409, 0.0
    %v551 = vmax.f32 %v411, 0.0
    %v552 = vmax.f32 %v414, 0.0
    %v553 = vmax.f32 %v416, 0.0
    %v554 = vmax.f32 %v419, 0.0
    %v555 = vmax.f32 %v421, 0.0
    %v556 = vmax.f32 %v424, 0.0
    %v557 = vmax.f32 %v426, 0.0
    %v558 = vmax.f32 %v429, 0.0
    %v559 = vmax.f32 %v431, 0.0
    %v560 = vmax.f32 %v434, 0.0
    %v561 = vmax.f32 %v436, 0.0
    %v562 = vmax.f32 %v439, 0.0
    %v563 = vmax.f32 %v441, 0.0
    %v564 = vmax.f32 %v444, 0.0
    %v565 = vmax.f32 %v446, 0.0
    %v566 = vmax.f32 %v449, 0.0
    %v567 = vmax.f32 %v451, 0.0
    %v568 = vmax.f32 %v454, 0.0
    %v569 = vmax.f32 %v456, 0.0
    %v570 = vmax.f32 %v459, 0.0
    %v571 = vmax.f32 %v461, 0.0
    %v572 = vmax.f32 %v464, 0.0
    %v573 = vmax.f32 %v466, 0.0
    %v574 = vmax.f32 %v469, 0.0
    %v575 = vmax.f32 %v471, 0.0
    %v576 = vmax.f32 %v474, 0.0
    %v577 = vmax.f32 %v476, 0.0
    %v578 = vmax.f32 %v479, 0.0
    %v579 = vmax.f32 %v481, 0.0
    %v580 = vmax.f32 %v484, 0.0
    %v581 = vmax.f32 %v486, 0.0
    %v582 = vmax.f32 %v489, 0.0
    %v583 = vmax.f32 %v491, 0.0
    %v584 = vmax.f32 %v494, 0.0
    %v585 = vmax.f32 %v496, 0.0
    %v586 = vmax.f32 %v499, 0.0
    %v587 = vmax.f32 %v501, 0.0
    %v588 = vmax.f32 %v504, 0.0
    %v589 = vmax.f32 %v506, 0.0
    %v590 = vmax.f32 %v509, 0.0
    %v591 = vmax.f32 %v511, 0.0
    %v592 = vmax.f32 %v514, 0.0
    %v593 = vmax.f32 %v516, 0.0
    %v594 = vmax.f32 %v519, 0.0
    %v595 = vmax.f32 %v521, 0.0
    %v596 = vmax.f32 %v524, 0.0
    %v597 = vmax.f32 %v526, 0.0
    %v598 = vmax.f32 %v529, 0.0
    %v599 = vmax.f32 %v531, 0.0
    %v600 = vmax.f32 %v534, 0.0
    %v601 = vmax.f32 %v536, 0.0
    %v602 = vpack.c.bf16 %v538, %v538
    %v603 = vpack.c.bf16 %v539, %v539
    %v604 = vpack.c.bf16 %v540, %v540
    %v605 = vpack.c.bf16 %v541, %v541
    %v606 = vpack.c.bf16 %v542, %v542
    %v607 = vpack.c.bf16 %v543, %v543
    %v608 = vpack.c.bf16 %v544, %v544
    %v609 = vpack.c.bf16 %v545, %v545
    %v610 = vpack.c.bf16 %v546, %v546
    %v611 = vpack.c.bf16 %v547, %v547
    %v612 = vpack.c.bf16 %v548, %v548
    %v613 = vpack.c.bf16 %v549, %v549
    %v614 = vpack.c.bf16 %v550, %v550
    %v615 = vpack.c.bf16 %v551, %v551
    %v616 = vpack.c.bf16 %v552, %v552
    %v617 = vpack.c.bf16 %v553, %v553
    %v618 = vpack.c.bf16 %v554, %v554
    %v619 = vpack.c.bf16 %v555, %v555
    %v620 = vpack.c.bf16 %v556, %v556
    %v621 = vpack.c.bf16 %v557, %v557
    %v622 = vpack.c.bf16 %v558, %v558
    %v623 = vpack.c.bf16 %v559, %v559
    %v624 = vpack.c.bf16 %v560, %v560
    %v625 = vpack.c.bf16 %v561, %v561
    %v626 = vpack.c.bf16 %v562, %v562
    %v627 = vpack.c.bf16 %v563, %v563
    %v628 = vpack.c.bf16 %v564, %v564
    %v629 = vpack.c.bf16 %v565, %v565
    %v630 = vpack.c.bf16 %v566, %v566
    %v631 = vpack.c.bf16 %v567, %v567
    %v632 = vpack.c.bf16 %v568, %v568
    %v633 = vpack.c.bf16 %v569, %v569
    %v634 = vpack.c.bf16 %v570, %v570
    %v635 = vpack.c.bf16 %v571, %v571
    %v636 = vpack.c.bf16 %v572, %v572
    %v637 = vpack.c.bf16 %v573, %v573
    %v638 = vpack.c.bf16 %v574, %v574
    %v639 = vpack.c.bf16 %v575, %v575
    %v640 = vpack.c.bf16 %v576, %v576
    %v641 = vpack.c.bf16 %v577, %v577
    %v642 = vpack.c.bf16 %v578, %v578
    %v643 = vpack.c.bf16 %v579, %v579
    %v644 = vpack.c.bf16 %v580, %v580
    %v645 = vpack.c.bf16 %v581, %v581
    %v646 = vpack.c.bf16 %v582, %v582
    %v647 = vpack.c.bf16 %v583, %v583
    %v648 = vpack.c.bf16 %v584, %v584
    %v649 = vpack.c.bf16 %v585, %v585
    %v650 = vpack.c.bf16 %v586, %v586
    %v651 = vpack.c.bf16 %v587, %v587
    %v652 = vpack.c.bf16 %v588, %v588
    %v653 = vpack.c.bf16 %v589, %v589
    %v654 = vpack.c.bf16 %v590, %v590
    %v655 = vpack.c.bf16 %v591, %v591
    %v656 = vpack.c.bf16 %v592, %v592
    %v657 = vpack.c.bf16 %v593, %v593
    %v658 = vpack.c.bf16 %v594, %v594
    %v659 = vpack.c.bf16 %v595, %v595
    %v660 = vpack.c.bf16 %v596, %v596
    %v661 = vpack.c.bf16 %v597, %v597
    %v662 = vpack.c.bf16 %v598, %v598
    %v663 = vpack.c.bf16 %v599, %v599
    %v664 = vpack.c.bf16 %v600, %v600
    %v665 = vpack.c.bf16 %v601, %v601
    %666 = vst [vmem:[#allocation6] sm:$0xf] %v602
    %667 = vst [vmem:[#allocation6 + $0x4] sm:$0xf] %v603
    %668 = vst [vmem:[#allocation6 + $0x8] sm:$0xf] %v604
    %669 = vst [vmem:[#allocation6 + $0xc] sm:$0xf] %v605
    %670 = vst [vmem:[#allocation6 + $0x10] sm:$0xf] %v606
    %671 = vst [vmem:[#allocation6 + $0x14] sm:$0xf] %v607
    %672 = vst [vmem:[#allocation6 + $0x18] sm:$0xf] %v608
    %673 = vst [vmem:[#allocation6 + $0x1c] sm:$0xf] %v609
    %674 = vst [vmem:[#allocation6 + $0x20] sm:$0xf] %v610
    %675 = vst [vmem:[#allocation6 + $0x24] sm:$0xf] %v611
    %676 = vst [vmem:[#allocation6 + $0x28] sm:$0xf] %v612
    %677 = vst [vmem:[#allocation6 + $0x2c] sm:$0xf] %v613
    %678 = vst [vmem:[#allocation6 + $0x30] sm:$0xf] %v614
    %679 = vst [vmem:[#allocation6 + $0x34] sm:$0xf] %v615
    %680 = vst [vmem:[#allocation6 + $0x38] sm:$0xf] %v616
    %681 = vst [vmem:[#allocation6 + $0x3c] sm:$0xf] %v617
    %682 = vst [vmem:[#allocation6 + $0x40] sm:$0xf] %v618
    %683 = vst [vmem:[#allocation6 + $0x44] sm:$0xf] %v619
    %684 = vst [vmem:[#allocation6 + $0x48] sm:$0xf] %v620
    %685 = vst [vmem:[#allocation6 + $0x4c] sm:$0xf] %v621
    %686 = vst [vmem:[#allocation6 + $0x50] sm:$0xf] %v622
    %687 = vst [vmem:[#allocation6 + $0x54] sm:$0xf] %v623
    %688 = vst [vmem:[#allocation6 + $0x58] sm:$0xf] %v624
    %689 = vst [vmem:[#allocation6 + $0x5c] sm:$0xf] %v625
    %690 = vst [vmem:[#allocation6 + $0x60] sm:$0xf] %v626
    %691 = vst [vmem:[#allocation6 + $0x64] sm:$0xf] %v627
    %692 = vst [vmem:[#allocation6 + $0x68] sm:$0xf] %v628
    %693 = vst [vmem:[#allocation6 + $0x6c] sm:$0xf] %v629
    %694 = vst [vmem:[#allocation6 + $0x70] sm:$0xf] %v630
    %695 = vst [vmem:[#allocation6 + $0x74] sm:$0xf] %v631
    %696 = vst [vmem:[#allocation6 + $0x78] sm:$0xf] %v632
    %697 = vst [vmem:[#allocation6 + $0x7c] sm:$0xf] %v633
    %698 = vst [vmem:[#allocation6 + $0x80] sm:$0xf] %v634
    %699 = vst [vmem:[#allocation6 + $0x84] sm:$0xf] %v635
    %700 = vst [vmem:[#allocation6 + $0x88] sm:$0xf] %v636
    %701 = vst [vmem:[#allocation6 + $0x8c] sm:$0xf] %v637
    %702 = vst [vmem:[#allocation6 + $0x90] sm:$0xf] %v638
    %703 = vst [vmem:[#allocation6 + $0x94] sm:$0xf] %v639
    %704 = vst [vmem:[#allocation6 + $0x98] sm:$0xf] %v640
    %705 = vst [vmem:[#allocation6 + $0x9c] sm:$0xf] %v641
    %706 = vst [vmem:[#allocation6 + $0xa0] sm:$0xf] %v642
    %707 = vst [vmem:[#allocation6 + $0xa4] sm:$0xf] %v643
    %708 = vst [vmem:[#allocation6 + $0xa8] sm:$0xf] %v644
    %709 = vst [vmem:[#allocation6 + $0xac] sm:$0xf] %v645
    %710 = vst [vmem:[#allocation6 + $0xb0] sm:$0xf] %v646
    %711 = vst [vmem:[#allocation6 + $0xb4] sm:$0xf] %v647
    %712 = vst [vmem:[#allocation6 + $0xb8] sm:$0xf] %v648
    %713 = vst [vmem:[#allocation6 + $0xbc] sm:$0xf] %v649
    %714 = vst [vmem:[#allocation6 + $0xc0] sm:$0xf] %v650
    %715 = vst [vmem:[#allocation6 + $0xc4] sm:$0xf] %v651
    %716 = vst [vmem:[#allocation6 + $0xc8] sm:$0xf] %v652
    %717 = vst [vmem:[#allocation6 + $0xcc] sm:$0xf] %v653
    %718 = vst [vmem:[#allocation6 + $0xd0] sm:$0xf] %v654
    %719 = vst [vmem:[#allocation6 + $0xd4] sm:$0xf] %v655
    %720 = vst [vmem:[#allocation6 + $0xd8] sm:$0xf] %v656
    %721 = vst [vmem:[#allocation6 + $0xdc] sm:$0xf] %v657
    %722 = vst [vmem:[#allocation6 + $0xe0] sm:$0xf] %v658
    %723 = vst [vmem:[#allocation6 + $0xe4] sm:$0xf] %v659
    %724 = vst [vmem:[#allocation6 + $0xe8] sm:$0xf] %v660
    %725 = vst [vmem:[#allocation6 + $0xec] sm:$0xf] %v661
    %726 = vst [vmem:[#allocation6 + $0xf0] sm:$0xf] %v662
    %727 = vst [vmem:[#allocation6 + $0xf4] sm:$0xf] %v663
    %728 = vst [vmem:[#allocation6 + $0xf8] sm:$0xf] %v664
    %729 = vst [vmem:[#allocation6 + $0xfc] sm:$0xf] %v665
    %v730 = vld [vmem:[#allocation2] sm:$0x3]
    %v731 = vadd.f32 %v538, %v539
    %v732 = vadd.f32 %v731, %v540
    %v733 = vadd.f32 %v732, %v541
    %v734 = vadd.f32 %v733, %v542
    %v735 = vadd.f32 %v734, %v543
    %v736 = vadd.f32 %v735, %v544
    %v737 = vadd.f32 %v736, %v545
    %v738 = vadd.f32 %v737, %v546
    %v739 = vadd.f32 %v738, %v547
    %v740 = vadd.f32 %v739, %v548
    %v741 = vadd.f32 %v740, %v549
    %v742 = vadd.f32 %v741, %v550
    %v743 = vadd.f32 %v742, %v551
    %v744 = vadd.f32 %v743, %v552
    %v745 = vadd.f32 %v744, %v553
    %v746 = vadd.f32 %v745, %v554
    %v747 = vadd.f32 %v746, %v555
    %v748 = vadd.f32 %v747, %v556
    %v749 = vadd.f32 %v748, %v557
    %v750 = vadd.f32 %v749, %v558
    %v751 = vadd.f32 %v750, %v559
    %v752 = vadd.f32 %v751, %v560
    %v753 = vadd.f32 %v752, %v561
    %v754 = vadd.f32 %v753, %v562
    %v755 = vadd.f32 %v754, %v563
    %v756 = vadd.f32 %v755, %v564
    %v757 = vadd.f32 %v756, %v565
    %v758 = vadd.f32 %v757, %v566
    %v759 = vadd.f32 %v758, %v567
    %v760 = vadd.f32 %v759, %v568
    %v761 = vadd.f32 %v760, %v569
    %v762 = vrot.slane %v761, 4
    %v763 = vadd.f32 %v761, %v762
    %v764 = vrot.slane %v763, 2
    %v765 = vadd.f32 %v763, %v764
    %v766 = vrot.slane %v765, 1
    %v767 = vadd.f32 %v765, %v766
    %v768 = vadd.f32 %v570, %v571
    %v769 = vadd.f32 %v768, %v572
    %v770 = vadd.f32 %v769, %v573
    %v771 = vadd.f32 %v770, %v574
    %v772 = vadd.f32 %v771, %v575
    %v773 = vadd.f32 %v772, %v576
    %v774 = vadd.f32 %v773, %v577
    %v775 = vadd.f32 %v774, %v578
    %v776 = vadd.f32 %v775, %v579
    %v777 = vadd.f32 %v776, %v580
    %v778 = vadd.f32 %v777, %v581
    %v779 = vadd.f32 %v778, %v582
    %v780 = vadd.f32 %v779, %v583
    %v781 = vadd.f32 %v780, %v584
    %v782 = vadd.f32 %v781, %v585
    %v783 = vadd.f32 %v782, %v586
    %v784 = vadd.f32 %v783, %v587
    %v785 = vadd.f32 %v784, %v588
    %v786 = vadd.f32 %v785, %v589
    %v787 = vadd.f32 %v786, %v590
    %v788 = vadd.f32 %v787, %v591
    %v789 = vadd.f32 %v788, %v592
    %v790 = vadd.f32 %v789, %v593
    %v791 = vadd.f32 %v790, %v594
    %v792 = vadd.f32 %v791, %v595
    %v793 = vadd.f32 %v792, %v596
    %v794 = vadd.f32 %v793, %v597
    %v795 = vadd.f32 %v794, %v598
    %v796 = vadd.f32 %v795, %v599
    %v797 = vadd.f32 %v796, %v600
    %v798 = vadd.f32 %v797, %v601
    %v799 = vrot.slane %v798, 4
    %v800 = vadd.f32 %v798, %v799
    %v801 = vrot.slane %v800, 2
    %v802 = vadd.f32 %v800, %v801
    %v803 = vrot.slane %v802, 1
    %v804 = vadd.f32 %v802, %v803
    %vm807 = vcmask 1041409
    %v808 = vsel %vm807, %v804, %v767
    %v810 = vadd.f32 %v730, %v808
    %811 = vst [vmem:[#allocation2] sm:$0x3] %v810
    // Predicated region
    $region30: #{tpu_custom_call.1} parent=1 // pred_check
      %p812 = pneg %p40
    $region31: #{tpu_custom_call.1} parent=1 // pred_check_branch
      %814 = sbr.rel (%p812) target = $region33
    $region32: #{tpu_custom_call.1} parent=1 // pred_region
      %v815 = vld [vmem:[#allocation2] sm:$0x3]
      %v816 = vmul.f32 %v815, 0.00390625
      %v817 = vld [vmem:[%s3] sm:$0xff]
      %v818 = vld [vmem:[%s3 + $0x8] sm:$0xff]
      %v819 = vld [vmem:[%s3 + $0x10] sm:$0xff]
      %v820 = vld [vmem:[%s3 + $0x18] sm:$0xff]
      %v821 = vld [vmem:[%s3 + $0x20] sm:$0xff]
      %v822 = vld [vmem:[%s3 + $0x28] sm:$0xff]
      %v823 = vld [vmem:[%s3 + $0x30] sm:$0xff]
      %v824 = vld [vmem:[%s3 + $0x38] sm:$0xff]
      %v825 = vld [vmem:[%s3 + $0x40] sm:$0xff]
      %v826 = vld [vmem:[%s3 + $0x48] sm:$0xff]
      %v827 = vld [vmem:[%s3 + $0x50] sm:$0xff]
      %v828 = vld [vmem:[%s3 + $0x58] sm:$0xff]
      %v829 = vld [vmem:[%s3 + $0x60] sm:$0xff]
      %v830 = vld [vmem:[%s3 + $0x68] sm:$0xff]
      %v831 = vld [vmem:[%s3 + $0x70] sm:$0xff]
      %v832 = vld [vmem:[%s3 + $0x78] sm:$0xff]
      %v833 = vld [vmem:[%s4] sm:$0x1]
      %v835 = vperm.slane %v833, 0
      %837 = vmatpush.msra.mxu0 %v832
      %838 = vmatpush.msra.mxu0 %v831
      %839 = vmatpush.msra.mxu0 %v830
      %840 = vmatpush.msra.mxu0 %v829
      %841 = vmatpush.msra.mxu0 %v828
      %842 = vmatpush.msra.mxu0 %v827
      %843 = vmatpush.msra.mxu0 %v826
      %844 = vmatpush.msra.mxu0 %v825
      %845 = vmatpush.msra.mxu0 %v824
      %846 = vmatpush.msra.mxu0 %v823
      %847 = vmatpush.msra.mxu0 %v822
      %848 = vmatpush.msra.mxu0 %v821
      %849 = vmatpush.msra.mxu0 %v820
      %850 = vmatpush.msra.mxu0 %v819
      %851 = vmatpush.msra.mxu0 %v818
      %852 = vmatpush.msra.mxu0 %v817
      %853 = vmatmul.f32.gmra.mxu0 %v816
      %v854 = vpop.f32.mrf.mxu0
      %v855 = vadd.f32 %v835, %v854
      %856 = vdwg.mxu0
      %v857 = vsub.f32 0.0, %v855
      %v858 = vmul.f32 %v857, 1.442695
      %v859 = vpow.pop %v858
      %v860 = vadd.f32 %v859, 1.0
      %v861 = vrcp.pop %v860
      %v862 = vmul.f32 %v860, %v861
      %v863 = vsub.f32 1.0, %v862
      %v864 = vmul.f32 %v861, %v863
      %v865 = vadd.f32 %v861, %v864
      %vm866 = vweird.f32 %v860
      %vm867 = vweird.f32 %v861
      %vm868 = vmor %vm866, %vm867
      %v869 = vsel %vm868, %v861, %v865
      %v870 = vand.u32 2147483647, %v860
      %vm871 = vcmp.eq.f32.partialorder %v870, 8.507059e+37
      %v872 = vand.u32 %v860, 2147483648
      %v873 = vor.u32 1.1754944e-38, %v872
      %v874 = vsel %vm871, %v873, %v869
      %v875 = vmul.f32 1.0, %v874
      %v877 = vrot.slane %v875, 1
      %vm879 = vcmask 57344
      %880 = vst.msk [vmem:[#allocation7] sm:$0x1] %vm879, %v875
      %881 = vst.msk [vmem:[#allocation7 + $0x1] sm:$0x1] %vm879, %v877
    $region33: #{tpu_custom_call.1} parent=1 // pred_fallthru
      _
    // Predicated region
    $region34: #{tpu_custom_call.1} parent=1 // pred_check
      _
    $region35: #{tpu_custom_call.1} parent=1 // pred_check_branch
      %883 = sbr.rel (0) target = $region37
    $region36: #{tpu_custom_call.1} parent=1 // pred_region
      %885 = vsyncadd [#allocation5], 0
      %s886 = sshll.u32 [#allocation6], 4
      %s887 = int_to_ptr.vmem [resolvable:$true] %s886
      %s888 = sshll.u32 %s5, 4
      %s889 = int_to_ptr.hbm [resolvable:$true] %s888
      %894 = dma.vmem_to_hbm [thread:$0]  %s887, 4096, %s889, [#allocation5], 64, 64, 4
    $region37: #{tpu_custom_call.1} parent=1 // pred_fallthru
      _
    // Predicated region
    $region38: #{tpu_custom_call.1} parent=1 // pred_check
      _
    $region39: #{tpu_custom_call.1} parent=1 // pred_check_branch
      %896 = sbr.rel (0) target = $region41
    $region40: #{tpu_custom_call.1} parent=1 // pred_region
      %898 = vsyncadd [#allocation8], 0
      %s899 = sshll.u32 [#allocation7], 4
      %s900 = int_to_ptr.vmem [resolvable:$true] %s899
      %s901 = sshll.u32 %s6, 4
      %s902 = int_to_ptr.hbm [resolvable:$true] %s901
      %907 = dma.vmem_to_hbm [thread:$0]  %s900, 32, %s902, [#allocation8], 16, 16, 1
    $region41: #{tpu_custom_call.1} parent=1 // pred_fallthru
      _
    // Predicated region
    $region42: #{tpu_custom_call.1} parent=1 // pred_check
      _
    $region43: #{tpu_custom_call.1} parent=1 // pred_check_branch
      %909 = sbr.rel (0) target = $region45
    $region44: #{tpu_custom_call.1} parent=1 // pred_region
      %911 = dma.done [#allocation5], 4096
    $region45: #{tpu_custom_call.1} parent=1 // pred_fallthru
      _
    // Predicated region
    $region46: #{tpu_custom_call.1} parent=1 // pred_check
      _
    $region47: #{tpu_custom_call.1} parent=1 // pred_check_branch
      %913 = sbr.rel (0) target = $region49
    $region48: #{tpu_custom_call.1} parent=1 // pred_region
      %915 = dma.done [#allocation8], 32
    $region49: #{tpu_custom_call.1} parent=1 // pred_fallthru
      _
    %916 = vsyncpa [#allocation4], 1
    %917 = vsyncpa [#allocation5], 1
    %918 = vsyncpa [#allocation8], 1

</llo_original>
